<compile_context>
chip_gen: v5e
topology: v5e:2x2
jax: 0.10.0
libtpu: 0.0.40
codegen_flags: <defaults>
</compile_context>

<pallas_src>
import functools
import math

import jax
import jax.numpy as jnp
from jax.experimental import pallas as pl
from jax.experimental.pallas import tpu as pltpu


# ----------------------------- Pallas kernel -------------------------------

def _gcn_fused_kernel(*refs, n_layers, relu_flags):
    """Fused GCN forward: per layer (adj @ (h @ W_l) + b_l [+relu]),
    then log_softmax over the class lanes.  All intermediates stay in
    VMEM/vregs; MXU operands are bf16, accumulation & epilogue are f32."""
    x_ref = refs[0]
    adj_ref = refs[1]
    wb_refs = refs[2:2 + 2 * n_layers]
    o_ref = refs[2 + 2 * n_layers]

    adj = adj_ref[...]                                   # bf16 (at rest)
    h = x_ref[...]                                       # bf16 (at rest)
    for l in range(n_layers):
        w = wb_refs[2 * l][...]                          # bf16 (at rest)
        b = wb_refs[2 * l + 1][...]                      # (1, F_out) f32
        support = jnp.dot(h, w, preferred_element_type=jnp.float32)
        out = jnp.dot(adj, support.astype(jnp.bfloat16),
                      preferred_element_type=jnp.float32)
        out = out + b
        if relu_flags[l]:
            out = jnp.maximum(out, 0.0)
        # Keep hidden activations bf16 for the next layer's MXU pass;
        # final-layer logits stay f32 for the log_softmax epilogue.
        h = out.astype(jnp.bfloat16) if l < n_layers - 1 else out
        # TODO(synk): F.dropout is identity in eval mode; training-mode dropout
        # (pltpu.prng_random_bits mask) not implemented.

    # log_softmax over the (unpadded) class lanes, f32.
    m = jnp.max(h, axis=1, keepdims=True)
    s = h - m
    lse = jnp.log(jnp.sum(jnp.exp(s), axis=1, keepdims=True))
    o_ref[...] = (s - lse).astype(o_ref.dtype)


# ------------------------------ GCN wrapper --------------------------------

def init_gcn_params(key, nfeat, nhids, nclass):
    """Matches GraphConvolution.reset_parameters: U(-stdv, stdv), stdv=1/sqrt(out)."""
    n_ins = [nfeat] + list(nhids)
    n_outs = list(nhids) + [nclass]
    params = []
    for n_in, n_out in zip(n_ins, n_outs):
        key, kw, kb = jax.random.split(key, 3)
        stdv = 1.0 / math.sqrt(n_out)
        w = jax.random.uniform(kw, (n_in, n_out), jnp.float32, -stdv, stdv)
        b = jax.random.uniform(kb, (1, n_out), jnp.float32, -stdv, stdv)
        params.append((w, b))
    return params


def prepare_gcn_inputs(x, adj, params, operand_dtype=jnp.bfloat16):
    """One-time (per model / per graph) operand preparation, hoisted out of
    the per-call path: MXU operands (x, adj, weights) stored bf16 at rest,
    biases kept f32 for the f32 epilogue.  No shape padding is needed."""
    x_c = jnp.asarray(x, operand_dtype)
    adj_c = jnp.asarray(adj, operand_dtype)
    flat_wb = []
    for (w, b) in params:
        flat_wb.append(jnp.asarray(w, operand_dtype))
        flat_wb.append(jnp.asarray(b, jnp.float32).reshape(1, -1))
    return x_c, adj_c, tuple(flat_wb)


def gcn_forward(x_c, adj_c, flat_wb, with_relu=True, relu_on_last=True):
    """Fused GCN forward (eval mode) in a single pallas_call.

    Inputs must come from prepare_gcn_inputs (bf16 operands, f32 biases)."""
    n, nfeat = x_c.shape
    n_layers = len(flat_wb) // 2
    nclass = flat_wb[-2].shape[1]

    relu_flags = tuple(
        bool(with_relu) and (l < n_layers - 1 or relu_on_last)
        for l in range(n_layers))

    kernel = functools.partial(
        _gcn_fused_kernel, n_layers=n_layers, relu_flags=relu_flags)

    # Advisory cost hint for XLA's scheduler.
    dims = [nfeat] + [flat_wb[2 * l].shape[1] for l in range(n_layers)]
    flops = 0
    for l in range(n_layers):
        flops += 2 * n * dims[l] * dims[l + 1]       # h @ W_l
        flops += 2 * n * n * dims[l + 1]             # adj @ support
    transcendentals = n * nclass + n                 # exp per logit + log per row
    bytes_accessed = (
        sum(int(a.size) * a.dtype.itemsize for a in (x_c, adj_c, *flat_wb))
        + n * nclass * 4)

    vmem = pl.BlockSpec(memory_space=pltpu.MemorySpace.VMEM)
    # TODO(synk): large-graph path (N in the thousands): switch to a row-block
    # grid (rows "parallel" for v7x's 2 TCs, adj K-axis trailing "arbitrary"
    # with a VMEM f32 accumulator + pl.when init/finalize), 256-wide K/N tiles
    # on v6e/v7x (128 on v5e), pipeline_mode=pl.Buffered(3) on the adj spec,
    # explicit vmem_limit_bytes (v7x: 64 MiB physical / 32 MiB scoped default;
    # v5e scoped default is only 16 MiB), and bf16 (or fp8 on v7x -- no int8
    # MXU there) adj since that regime is HBM-bound on the adj stream.
    # At N<=128 a single whole-array block (<20 KiB VMEM) is optimal.
    return pl.pallas_call(
        kernel,
        out_shape=jax.ShapeDtypeStruct((n, nclass), jnp.float32),
        in_specs=[vmem] * (2 + len(flat_wb)),
        out_specs=vmem,
        cost_estimate=pl.CostEstimate(
            flops=flops,
            transcendentals=transcendentals,
            bytes_accessed=bytes_accessed),
    )(x_c, adj_c, *flat_wb)


def gcn_forward_ref(x, adj, params, with_relu=True, relu_on_last=True):
    """Pure-JAX f32 reference for sanity checking."""
    n_layers = len(params)
    h = x
    for l, (w, b) in enumerate(params):
        h = adj @ (h @ w) + b
        if with_relu and (l < n_layers - 1 or relu_on_last):
            h = jnp.maximum(h, 0.0)
    return jax.nn.log_softmax(h, axis=1)


# --------------------------------- main -------------------------------------

def normalize_adj(a):
    """Symmetric normalization D^-1/2 (A + I) D^-1/2 (plain-JAX glue)."""
    n = a.shape[0]
    a = a + jnp.eye(n, dtype=a.dtype)
    deg = jnp.sum(a, axis=1)
    d_inv_sqrt = 1.0 / jnp.sqrt(jnp.maximum(deg, 1e-12))
    return a * d_inv_sqrt[:, None] * d_inv_sqrt[None, :]


if __name__ == "__main__":
    key = jax.random.PRNGKey(0)

    N, NFEAT, NHIDS, NCLASS = 64, 32, [16], 8

    k_feat, k_adj, k_param = jax.random.split(key, 3)

    # Node features [N, NFEAT]
    x = jax.random.normal(k_feat, (N, NFEAT), dtype=jnp.float32)

    # Random symmetric binary adjacency, then normalized (dense).
    raw = (jax.random.uniform(k_adj, (N, N)) < 0.1).astype(jnp.float32)
    raw = jnp.maximum(raw, raw.T)
    adj = normalize_adj(raw)

    params = init_gcn_params(k_param, NFEAT, NHIDS, NCLASS)

    # One-time operand prep (hoisted out of the per-call path).
    x_c, adj_c, flat_wb = prepare_gcn_inputs(x, adj, params)
    x_c, adj_c, flat_wb = jax.block_until_ready((x_c, adj_c, flat_wb))

    fwd = jax.jit(functools.partial(gcn_forward, with_relu=True,
                                    relu_on_last=True))
    out = fwd(x_c, adj_c, flat_wb)
    out = jax.block_until_ready(out)

    assert out.shape == (N, NCLASS)
    # log_softmax rows should (log-)sum to ~0.
    row_logsumexp = jax.scipy.special.logsumexp(out, axis=1)
    assert jnp.max(jnp.abs(row_logsumexp)) < 1e-4
    # Loose comparison vs. f32 reference (kernel uses bf16 MXU operands).
    ref = gcn_forward_ref(x, adj, params, with_relu=True, relu_on_last=True)
    assert jnp.max(jnp.abs(out - ref)) < 0.1

    print("KERNEL_OK")
</pallas_src>

<mosaic_0001>
module attributes {stable_mosaic.version = 11 : i64} {
  func.func @_gcn_fused_kernel(%arg0: memref<64x32xbf16, #tpu.memory_space<vmem>>, %arg1: memref<64x64xbf16, #tpu.memory_space<vmem>>, %arg2: memref<32x16xbf16, #tpu.memory_space<vmem>>, %arg3: memref<1x16xf32, #tpu.memory_space<vmem>>, %arg4: memref<16x8xbf16, #tpu.memory_space<vmem>>, %arg5: memref<1x8xf32, #tpu.memory_space<vmem>>, %arg6: memref<64x8xf32, #tpu.memory_space<vmem>>) attributes {dimension_semantics = [], scalar_prefetch = 0 : i64, scratch_operands = 0 : i64, tpu.core_type = #tpu.core_type<tc>} {
    %c0 = arith.constant 0 : index
    %c0_0 = arith.constant 0 : index
    %0 = vector.load %arg1[%c0, %c0_0] : memref<64x64xbf16, #tpu.memory_space<vmem>>, vector<64x64xbf16>
    %c0_1 = arith.constant 0 : index
    %c0_2 = arith.constant 0 : index
    %1 = vector.load %arg0[%c0_1, %c0_2] : memref<64x32xbf16, #tpu.memory_space<vmem>>, vector<64x32xbf16>
    %c0_3 = arith.constant 0 : index
    %c0_4 = arith.constant 0 : index
    %2 = vector.load %arg2[%c0_3, %c0_4] : memref<32x16xbf16, #tpu.memory_space<vmem>>, vector<32x16xbf16>
    %c0_5 = arith.constant 0 : index
    %c0_6 = arith.constant 0 : index
    %3 = vector.load %arg3[%c0_5, %c0_6] : memref<1x16xf32, #tpu.memory_space<vmem>>, vector<1x16xf32>
    %cst = arith.constant dense<0.000000e+00> : vector<64x16xf32>
    %4 = tpu.matmul %1, %2, %cst {dimension_numbers = #tpu.dot_dimension_numbers<[1], [0], [0], [1], [0, 0, 1, 1], [], []>} : vector<64x32xbf16>, vector<32x16xbf16>, vector<64x16xf32> -> vector<64x16xf32>
    %5 = arith.truncf %4 : vector<64x16xf32> to vector<64x16xbf16>
    %cst_7 = arith.constant dense<0.000000e+00> : vector<64x16xf32>
    %6 = tpu.matmul %0, %5, %cst_7 {dimension_numbers = #tpu.dot_dimension_numbers<[1], [0], [0], [1], [0, 0, 1, 1], [], []>} : vector<64x64xbf16>, vector<64x16xbf16>, vector<64x16xf32> -> vector<64x16xf32>
    %7 = vector.broadcast %3 : vector<1x16xf32> to vector<64x16xf32>
    %8 = arith.addf %6, %7 : vector<64x16xf32>
    %cst_8 = arith.constant 0.000000e+00 : f32
    %9 = vector.broadcast %cst_8 : f32 to vector<64x16xf32>
    %10 = arith.maximumf %8, %9 : vector<64x16xf32>
    %11 = arith.truncf %10 : vector<64x16xf32> to vector<64x16xbf16>
    %c0_9 = arith.constant 0 : index
    %c0_10 = arith.constant 0 : index
    %12 = vector.load %arg4[%c0_9, %c0_10] : memref<16x8xbf16, #tpu.memory_space<vmem>>, vector<16x8xbf16>
    %c0_11 = arith.constant 0 : index
    %c0_12 = arith.constant 0 : index
    %13 = vector.load %arg5[%c0_11, %c0_12] : memref<1x8xf32, #tpu.memory_space<vmem>>, vector<1x8xf32>
    %cst_13 = arith.constant dense<0.000000e+00> : vector<64x8xf32>
    %14 = tpu.matmul %11, %12, %cst_13 {dimension_numbers = #tpu.dot_dimension_numbers<[1], [0], [0], [1], [0, 0, 1, 1], [], []>} : vector<64x16xbf16>, vector<16x8xbf16>, vector<64x8xf32> -> vector<64x8xf32>
    %15 = arith.truncf %14 : vector<64x8xf32> to vector<64x8xbf16>
    %cst_14 = arith.constant dense<0.000000e+00> : vector<64x8xf32>
    %16 = tpu.matmul %0, %15, %cst_14 {dimension_numbers = #tpu.dot_dimension_numbers<[1], [0], [0], [1], [0, 0, 1, 1], [], []>} : vector<64x64xbf16>, vector<64x8xbf16>, vector<64x8xf32> -> vector<64x8xf32>
    %17 = vector.broadcast %13 : vector<1x8xf32> to vector<64x8xf32>
    %18 = arith.addf %16, %17 : vector<64x8xf32>
    %cst_15 = arith.constant 0.000000e+00 : f32
    %19 = vector.broadcast %cst_15 : f32 to vector<64x8xf32>
    %20 = arith.maximumf %18, %19 : vector<64x8xf32>
    %cst_16 = arith.constant dense<0xFF800000> : vector<64xf32>
    %21 = vector.multi_reduction <maximumf>, %20, %cst_16 [1] : vector<64x8xf32> to vector<64xf32>
    %22 = vector.shape_cast %21 : vector<64xf32> to vector<64x1xf32>
    %23 = vector.broadcast %22 : vector<64x1xf32> to vector<64x8xf32>
    %24 = arith.subf %20, %23 : vector<64x8xf32>
    %25 = math.exp %24 : vector<64x8xf32>
    %cst_17 = arith.constant dense<0.000000e+00> : vector<64xf32>
    %26 = vector.multi_reduction <add>, %25, %cst_17 [1] : vector<64x8xf32> to vector<64xf32>
    %27 = vector.shape_cast %26 : vector<64xf32> to vector<64x1xf32>
    %28 = math.log %27 : vector<64x1xf32>
    %29 = vector.broadcast %28 : vector<64x1xf32> to vector<64x8xf32>
    %30 = arith.subf %24, %29 : vector<64x8xf32>
    %c0_18 = arith.constant 0 : index
    %c0_19 = arith.constant 0 : index
    %31 = vector.load %arg6[%c0_18, %c0_19] : memref<64x8xf32, #tpu.memory_space<vmem>>, vector<64x8xf32>
    tpu.vector_store %arg6[%c0_18, %c0_19], %30 {strides = array<i32>} : memref<64x8xf32, #tpu.memory_space<vmem>>, vector<64x8xf32>,
    return
  }
}

</mosaic_0001>

<llo_original>
// kernel: gcn_forward.1
$region0: #{gcn_forward.1}
  #allocation0 [shape = 'u32[]', space=smem, size = 0x4, offset = 0x4, fixed_abs, tag = 'smem constant byte address 0x4 - core index']
  #allocation1 [shape = 'u32[72,128]{1,0:T(1,128)}', space=vmem, size = 0x9000, scoped, tag = 'internal scratch']
  %s0 = inlined_call_operand.vmem [shape: bf16[64,32], index: 0, kind: input, shape index: {}]
  %s1 = inlined_call_operand.vmem [shape: bf16[64,64], index: 1, kind: input, shape index: {}]
  %s2 = inlined_call_operand.vmem [shape: bf16[32,16], index: 2, kind: input, shape index: {}]
  %s3 = inlined_call_operand.vmem [shape: f32[1,16], index: 3, kind: input, shape index: {}]
  %s4 = inlined_call_operand.vmem [shape: bf16[16,8], index: 4, kind: input, shape index: {}]
  %s5 = inlined_call_operand.vmem [shape: f32[1,8], index: 5, kind: input, shape index: {}]
  %s6 = inlined_call_operand.vmem [shape: f32[64,8], index: 6, kind: output, shape index: {}]
  %s7 = sld [smem:[#allocation0]]
  $region34: #{gcn_forward.1} parent=0
    _
  %s9 = ssub.s32 1, %s7
  %s10 = scalar_select 0, %s9, %s7
  // Predicated region
  $region2: #{gcn_forward.1} parent=0 // pred_check
    _
  $region3: #{gcn_forward.1} parent=0 // pred_check_branch
    %12 = sbr.rel (0) target = $region5
  $region4: #{gcn_forward.1} parent=0 // pred_region
    _
  $region5: #{gcn_forward.1} parent=0 // pred_fallthru
    _
  // Predicated region
  $region6: #{gcn_forward.1} parent=0 // pred_check
    _
  $region7: #{gcn_forward.1} parent=0 // pred_check_branch
    %14 = sbr.rel (0) target = $region9
  $region8: #{gcn_forward.1} parent=0 // pred_region
    _
  $region9: #{gcn_forward.1} parent=0 // pred_fallthru
    _
  // Predicated region
  $region10: #{gcn_forward.1} parent=0 // pred_check
    _
  $region11: #{gcn_forward.1} parent=0 // pred_check_branch
    %16 = sbr.rel (0) target = $region13
  $region12: #{gcn_forward.1} parent=0 // pred_region
    _
  $region13: #{gcn_forward.1} parent=0 // pred_fallthru
    _
  // Predicated region
  $region14: #{gcn_forward.1} parent=0 // pred_check
    _
  $region15: #{gcn_forward.1} parent=0 // pred_check_branch
    %18 = sbr.rel (0) target = $region17
  $region16: #{gcn_forward.1} parent=0 // pred_region
    _
  $region17: #{gcn_forward.1} parent=0 // pred_fallthru
    _
  // Predicated region
  $region18: #{gcn_forward.1} parent=0 // pred_check
    _
  $region19: #{gcn_forward.1} parent=0 // pred_check_branch
    %20 = sbr.rel (0) target = $region21
  $region20: #{gcn_forward.1} parent=0 // pred_region
    _
  $region21: #{gcn_forward.1} parent=0 // pred_fallthru
    _
  // Predicated region
  $region22: #{gcn_forward.1} parent=0 // pred_check
    _
  $region23: #{gcn_forward.1} parent=0 // pred_check_branch
    %22 = sbr.rel (0) target = $region25
  $region24: #{gcn_forward.1} parent=0 // pred_region
    _
  $region25: #{gcn_forward.1} parent=0 // pred_fallthru
    _
  %v24 = vld [vmem:[%s1] sm:$0xf]
  %v25 = vld [vmem:[%s1 + $0x4] sm:$0xf]
  %v26 = vld [vmem:[%s1 + $0x8] sm:$0xf]
  %v27 = vld [vmem:[%s1 + $0xc] sm:$0xf]
  %v28 = vld [vmem:[%s1 + $0x10] sm:$0xf]
  %v29 = vld [vmem:[%s1 + $0x14] sm:$0xf]
  %v30 = vld [vmem:[%s1 + $0x18] sm:$0xf]
  %v31 = vld [vmem:[%s1 + $0x1c] sm:$0xf]
  %v32 = vld [vmem:[%s0] sm:$0xf]
  %v33 = vld [vmem:[%s0 + $0x4] sm:$0xf]
  %v34 = vld [vmem:[%s0 + $0x8] sm:$0xf]
  %v35 = vld [vmem:[%s0 + $0xc] sm:$0xf]
  %v36 = vld [vmem:[%s0 + $0x10] sm:$0xf]
  %v37 = vld [vmem:[%s0 + $0x14] sm:$0xf]
  %v38 = vld [vmem:[%s0 + $0x18] sm:$0xf]
  %v39 = vld [vmem:[%s0 + $0x1c] sm:$0xf]
  %v40 = vld [vmem:[%s2] sm:$0xf]
  %v41 = vld [vmem:[%s2 + $0x4] sm:$0xf]
  %v42 = vld [vmem:[%s2 + $0x8] sm:$0xf]
  %v43 = vld [vmem:[%s2 + $0xc] sm:$0xf]
  %v44 = vld [vmem:[%s3] sm:$0x1]
  %v53 = vunpack.c.l.b16 %v32
  %v54 = vunpack.c.l.b16 %v33
  %v55 = vunpack.c.l.b16 %v34
  %v56 = vunpack.c.l.b16 %v35
  %v57 = vunpack.c.l.b16 %v36
  %v58 = vunpack.c.l.b16 %v37
  %v59 = vunpack.c.l.b16 %v38
  %v60 = vunpack.c.l.b16 %v39
  %v61 = vpack.c.b16 %v54, %v53
  %v62 = vpack.c.b16 %v56, %v55
  %v63 = vpack.c.b16 %v58, %v57
  %v64 = vpack.c.b16 %v60, %v59
  %v69 = vunpack.c.l.b16 %v40
  %v70 = vunpack.c.l.b16 %v41
  %v71 = vunpack.c.l.b16 %v42
  %v72 = vunpack.c.l.b16 %v43
  %v73 = vpack.c.b16 %v70, %v69
  %v74 = vpack.c.b16 %v72, %v71
  %vm77 = vcmask 261120
  %v79 = vsel %vm77, %v61, 0
  %v82 = vsel %vm77, %v62, 0
  %v85 = vsel %vm77, %v63, 0
  %v88 = vsel %vm77, %v64, 0
  %90 = vmatpush.bf16.msra.mxu0 0
  %91 = vmatpush.bf16.msra.mxu0 0
  %92 = vmatpush.bf16.msra.mxu0 0
  %93 = vmatpush.bf16.msra.mxu0 0
  %94 = vmatpush.bf16.msra.mxu0 0
  %95 = vmatpush.bf16.msra.mxu0 0
  %96 = vmatpush.bf16.msra.mxu0 %v74
  %97 = vmatpush.bf16.msra.mxu0 %v73
  %98 = vmatmul.bf16.gmra.mxu0 %v79
  %v99 = vpop.f32.mrf.mxu0
  %v100 = vadd.f32 0.0, %v99
  %v101 = vpop.f32.mrf.mxu0
  %v102 = vadd.f32 0.0, %v101
  %103 = vmatmul.bf16.gmra.mxu0 %v82
  %v104 = vpop.f32.mrf.mxu0
  %v105 = vadd.f32 0.0, %v104
  %v106 = vpop.f32.mrf.mxu0
  %v107 = vadd.f32 0.0, %v106
  %108 = vmatmul.bf16.gmra.mxu0 %v85
  %v109 = vpop.f32.mrf.mxu0
  %v110 = vadd.f32 0.0, %v109
  %v111 = vpop.f32.mrf.mxu0
  %v112 = vadd.f32 0.0, %v111
  %113 = vmatmul.bf16.gmra.mxu0 %v88
  %v114 = vpop.f32.mrf.mxu0
  %v115 = vadd.f32 0.0, %v114
  %v116 = vpop.f32.mrf.mxu0
  %v117 = vadd.f32 0.0, %v116
  %118 = vdwg.mxu0
  %v119 = vpack.c.bf16 %v102, %v100
  %v120 = vpack.c.bf16 %v107, %v105
  %v121 = vpack.c.bf16 %v112, %v110
  %v122 = vpack.c.bf16 %v117, %v115
  %v124 = vperm.slane %v44, 0
  %v134 = vunpack.c.l.b16 %v24
  %v135 = vunpack.c.l.b16 %v25
  %v136 = vunpack.c.l.b16 %v26
  %v137 = vunpack.c.l.b16 %v27
  %v138 = vunpack.c.l.b16 %v28
  %v139 = vunpack.c.l.b16 %v29
  %v140 = vunpack.c.l.b16 %v30
  %v141 = vunpack.c.l.b16 %v31
  %v142 = vpack.c.b16 %v135, %v134
  %v143 = vpack.c.b16 %v137, %v136
  %v144 = vpack.c.b16 %v139, %v138
  %v145 = vpack.c.b16 %v141, %v140
  %vm146 = vcmask 523264
  %v148 = vsel %vm146, %v142, 0
  %v151 = vsel %vm146, %v143, 0
  %v154 = vsel %vm146, %v144, 0
  %v157 = vsel %vm146, %v145, 0
  %159 = vmatpush.bf16.msra.mxu0 0
  %160 = vmatpush.bf16.msra.mxu0 0
  %161 = vmatpush.bf16.msra.mxu0 0
  %162 = vmatpush.bf16.msra.mxu0 0
  %163 = vmatpush.bf16.msra.mxu0 %v122
  %164 = vmatpush.bf16.msra.mxu0 %v121
  %165 = vmatpush.bf16.msra.mxu0 %v120
  %166 = vmatpush.bf16.msra.mxu0 %v119
  %167 = vmatmul.bf16.gmra.mxu0 %v148
  %v168 = vpop.f32.mrf.mxu0
  %v169 = vadd.f32 %v124, %v168
  %v170 = vpop.f32.mrf.mxu0
  %v171 = vadd.f32 %v124, %v170
  %172 = vmatmul.bf16.gmra.mxu0 %v151
  %v173 = vpop.f32.mrf.mxu0
  %v174 = vadd.f32 %v124, %v173
  %v175 = vpop.f32.mrf.mxu0
  %v176 = vadd.f32 %v124, %v175
  %177 = vmatmul.bf16.gmra.mxu0 %v154
  %v178 = vpop.f32.mrf.mxu0
  %v179 = vadd.f32 %v124, %v178
  %v180 = vpop.f32.mrf.mxu0
  %v181 = vadd.f32 %v124, %v180
  %182 = vmatmul.bf16.gmra.mxu0 %v157
  %v183 = vpop.f32.mrf.mxu0
  %v184 = vadd.f32 %v124, %v183
  %v185 = vpop.f32.mrf.mxu0
  %v186 = vadd.f32 %v124, %v185
  %187 = vdwg.mxu0
  %v188 = vmax.f32 %v169, 0.0
  %v189 = vmax.f32 %v171, 0.0
  %v190 = vmax.f32 %v174, 0.0
  %v191 = vmax.f32 %v176, 0.0
  %v192 = vmax.f32 %v179, 0.0
  %v193 = vmax.f32 %v181, 0.0
  %v194 = vmax.f32 %v184, 0.0
  %v195 = vmax.f32 %v186, 0.0
  %v196 = vpack.c.bf16 %v189, %v188
  %v197 = vpack.c.bf16 %v191, %v190
  %v198 = vpack.c.bf16 %v193, %v192
  %v199 = vpack.c.bf16 %v195, %v194
  %v200 = vld [vmem:[%s4] sm:$0xf]
  %v201 = vld [vmem:[%s4 + $0x4] sm:$0xf]
  %v202 = vld [vmem:[%s5] sm:$0x1]
  %v205 = vunpack.c.l.b16 %v200
  %v206 = vunpack.c.l.b16 %v201
  %v207 = vpack.c.b16 %v206, %v205
  %vm209 = vcmask 130048
  %v211 = vsel %vm209, %v196, 0
  %v214 = vsel %vm209, %v197, 0
  %v217 = vsel %vm209, %v198, 0
  %v220 = vsel %vm209, %v199, 0
  %222 = vmatpush.bf16.msra.mxu0 0
  %223 = vmatpush.bf16.msra.mxu0 0
  %224 = vmatpush.bf16.msra.mxu0 0
  %225 = vmatpush.bf16.msra.mxu0 0
  %226 = vmatpush.bf16.msra.mxu0 0
  %227 = vmatpush.bf16.msra.mxu0 0
  %228 = vmatpush.bf16.msra.mxu0 0
  %229 = vmatpush.bf16.msra.mxu0 %v207
  %230 = vmatmul.bf16.gmra.mxu0 %v211
  %v231 = vpop.f32.mrf.mxu0
  %v232 = vadd.f32 0.0, %v231
  %v233 = vpop.f32.mrf.mxu0
  %v234 = vadd.f32 0.0, %v233
  %235 = vmatmul.bf16.gmra.mxu0 %v214
  %v236 = vpop.f32.mrf.mxu0
  %v237 = vadd.f32 0.0, %v236
  %v238 = vpop.f32.mrf.mxu0
  %v239 = vadd.f32 0.0, %v238
  %240 = vmatmul.bf16.gmra.mxu0 %v217
  %v241 = vpop.f32.mrf.mxu0
  %v242 = vadd.f32 0.0, %v241
  %v243 = vpop.f32.mrf.mxu0
  %v244 = vadd.f32 0.0, %v243
  %245 = vmatmul.bf16.gmra.mxu0 %v220
  %v246 = vpop.f32.mrf.mxu0
  %v247 = vadd.f32 0.0, %v246
  %v248 = vpop.f32.mrf.mxu0
  %v249 = vadd.f32 0.0, %v248
  %250 = vdwg.mxu0
  %v251 = vpack.c.bf16 %v234, %v232
  %v252 = vpack.c.bf16 %v239, %v237
  %v253 = vpack.c.bf16 %v244, %v242
  %v254 = vpack.c.bf16 %v249, %v247
  %v256 = vperm.slane %v202, 0
  %258 = vmatpush.bf16.msra.mxu0 0
  %259 = vmatpush.bf16.msra.mxu0 0
  %260 = vmatpush.bf16.msra.mxu0 0
  %261 = vmatpush.bf16.msra.mxu0 0
  %262 = vmatpush.bf16.msra.mxu0 %v254
  %263 = vmatpush.bf16.msra.mxu0 %v253
  %264 = vmatpush.bf16.msra.mxu0 %v252
  %265 = vmatpush.bf16.msra.mxu0 %v251
  %266 = vmatmul.bf16.gmra.mxu0 %v148
  %v267 = vpop.f32.mrf.mxu0
  %v268 = vadd.f32 %v256, %v267
  %v269 = vpop.f32.mrf.mxu0
  %v270 = vadd.f32 %v256, %v269
  %271 = vmatmul.bf16.gmra.mxu0 %v151
  %v272 = vpop.f32.mrf.mxu0
  %v273 = vadd.f32 %v256, %v272
  %v274 = vpop.f32.mrf.mxu0
  %v275 = vadd.f32 %v256, %v274
  %276 = vmatmul.bf16.gmra.mxu0 %v154
  %v277 = vpop.f32.mrf.mxu0
  %v278 = vadd.f32 %v256, %v277
  %v279 = vpop.f32.mrf.mxu0
  %v280 = vadd.f32 %v256, %v279
  %281 = vmatmul.bf16.gmra.mxu0 %v157
  %v282 = vpop.f32.mrf.mxu0
  %v283 = vadd.f32 %v256, %v282
  %v284 = vpop.f32.mrf.mxu0
  %v285 = vadd.f32 %v256, %v284
  %286 = vdwg.mxu0
  %v287 = vmax.f32 %v268, 0.0
  %v288 = vmax.f32 %v270, 0.0
  %v289 = vmax.f32 %v273, 0.0
  %v290 = vmax.f32 %v275, 0.0
  %v291 = vmax.f32 %v278, 0.0
  %v292 = vmax.f32 %v280, 0.0
  %v293 = vmax.f32 %v283, 0.0
  %v294 = vmax.f32 %v285, 0.0
  %vm295 = vcmask 64512
  %v296 = vsel %vm295, %v287, -inf
  %297 = vmax.xlane.f32.xlu0 %v296
  %v298 = vpop.xlane.xlu0 %297
  %v299 = vsel %vm295, %v288, -inf
  %300 = vmax.xlane.f32.xlu0 %v299
  %v301 = vpop.xlane.xlu0 %300
  %v302 = vsel %vm295, %v289, -inf
  %303 = vmax.xlane.f32.xlu0 %v302
  %v304 = vpop.xlane.xlu0 %303
  %v305 = vsel %vm295, %v290, -inf
  %306 = vmax.xlane.f32.xlu0 %v305
  %v307 = vpop.xlane.xlu0 %306
  %v308 = vsel %vm295, %v291, -inf
  %309 = vmax.xlane.f32.xlu0 %v308
  %v310 = vpop.xlane.xlu0 %309
  %v311 = vsel %vm295, %v292, -inf
  %312 = vmax.xlane.f32.xlu0 %v311
  %v313 = vpop.xlane.xlu0 %312
  %v314 = vsel %vm295, %v293, -inf
  %315 = vmax.xlane.f32.xlu0 %v314
  %v316 = vpop.xlane.xlu0 %315
  %v317 = vsel %vm295, %v294, -inf
  %318 = vmax.xlane.f32.xlu0 %v317
  %v319 = vpop.xlane.xlu0 %318
  %v320 = vsub.f32 %v287, %v298
  %v321 = vsub.f32 %v288, %v301
  %v322 = vsub.f32 %v289, %v304
  %v323 = vsub.f32 %v290, %v307
  %v324 = vsub.f32 %v291, %v310
  %v325 = vsub.f32 %v292, %v313
  %v326 = vsub.f32 %v293, %v316
  %v327 = vsub.f32 %v294, %v319
  %v328 = vmul.f32 %v320, 1.442695
  %v329 = vpow.pop %v328
  %v330 = vmul.f32 %v321, 1.442695
  %v331 = vpow.pop %v330
  %v332 = vmul.f32 %v322, 1.442695
  %v333 = vpow.pop %v332
  %v334 = vmul.f32 %v323, 1.442695
  %v335 = vpow.pop %v334
  %v336 = vmul.f32 %v324, 1.442695
  %v337 = vpow.pop %v336
  %v338 = vmul.f32 %v325, 1.442695
  %v339 = vpow.pop %v338
  %v340 = vmul.f32 %v326, 1.442695
  %v341 = vpow.pop %v340
  %v342 = vmul.f32 %v327, 1.442695
  %v343 = vpow.pop %v342
  %v344 = vsel %vm295, %v329, 0.0
  %345 = vadd.xlane.f32.xlu0 %v344
  %v346 = vpop.xlane.xlu0 %345
  %v347 = vsel %vm295, %v331, 0.0
  %348 = vadd.xlane.f32.xlu0 %v347
  %v349 = vpop.xlane.xlu0 %348
  %v350 = vsel %vm295, %v333, 0.0
  %351 = vadd.xlane.f32.xlu0 %v350
  %v352 = vpop.xlane.xlu0 %351
  %v353 = vsel %vm295, %v335, 0.0
  %354 = vadd.xlane.f32.xlu0 %v353
  %v355 = vpop.xlane.xlu0 %354
  %v356 = vsel %vm295, %v337, 0.0
  %357 = vadd.xlane.f32.xlu0 %v356
  %v358 = vpop.xlane.xlu0 %357
  %v359 = vsel %vm295, %v339, 0.0
  %360 = vadd.xlane.f32.xlu0 %v359
  %v361 = vpop.xlane.xlu0 %360
  %v362 = vsel %vm295, %v341, 0.0
  %363 = vadd.xlane.f32.xlu0 %v362
  %v364 = vpop.xlane.xlu0 %363
  %v365 = vsel %vm295, %v343, 0.0
  %366 = vadd.xlane.f32.xlu0 %v365
  %v367 = vpop.xlane.xlu0 %366
  %v368 = vlog2.pop %v346
  %v369 = vmul.f32 %v368, 0.6931472
  %v370 = vlog2.pop %v349
  %v371 = vmul.f32 %v370, 0.6931472
  %v372 = vlog2.pop %v352
  %v373 = vmul.f32 %v372, 0.6931472
  %v374 = vlog2.pop %v355
  %v375 = vmul.f32 %v374, 0.6931472
  %v376 = vlog2.pop %v358
  %v377 = vmul.f32 %v376, 0.6931472
  %v378 = vlog2.pop %v361
  %v379 = vmul.f32 %v378, 0.6931472
  %v380 = vlog2.pop %v364
  %v381 = vmul.f32 %v380, 0.6931472
  %v382 = vlog2.pop %v367
  %v383 = vmul.f32 %v382, 0.6931472
  %v384 = vsub.f32 %v320, %v369
  %v385 = vsub.f32 %v321, %v371
  %v386 = vsub.f32 %v322, %v373
  %v387 = vsub.f32 %v323, %v375
  %v388 = vsub.f32 %v324, %v377
  %v389 = vsub.f32 %v325, %v379
  %v390 = vsub.f32 %v326, %v381
  %v391 = vsub.f32 %v327, %v383
  %392 = vst.msk [vmem:[%s6] sm:$0xff] %vm295, %v384
  %393 = vst.msk [vmem:[%s6 + $0x8] sm:$0xff] %vm295, %v385
  %394 = vst.msk [vmem:[%s6 + $0x10] sm:$0xff] %vm295, %v386
  %395 = vst.msk [vmem:[%s6 + $0x18] sm:$0xff] %vm295, %v387
  %396 = vst.msk [vmem:[%s6 + $0x20] sm:$0xff] %vm295, %v388
  %397 = vst.msk [vmem:[%s6 + $0x28] sm:$0xff] %vm295, %v389
  %398 = vst.msk [vmem:[%s6 + $0x30] sm:$0xff] %vm295, %v390
  %399 = vst.msk [vmem:[%s6 + $0x38] sm:$0xff] %vm295, %v391
  // Predicated region
  $region26: #{gcn_forward.1} parent=0 // pred_check
    _
  $region27: #{gcn_forward.1} parent=0 // pred_check_branch
    %401 = sbr.rel (0) target = $region29
  $region28: #{gcn_forward.1} parent=0 // pred_region
    _
  $region29: #{gcn_forward.1} parent=0 // pred_fallthru
    _
  // Predicated region
  $region30: #{gcn_forward.1} parent=0 // pred_check
    _
  $region31: #{gcn_forward.1} parent=0 // pred_check_branch
    %403 = sbr.rel (0) target = $region33
  $region32: #{gcn_forward.1} parent=0 // pred_region
    _
  $region33: #{gcn_forward.1} parent=0 // pred_fallthru
    _

</llo_original>
